<compile_context>
chip_gen: v7x
topology: tpu7x:2x2x1
jax: 0.10.0
libtpu: 0.0.40
codegen_flags: <defaults>
</compile_context>

<pallas_src>
import math

import jax
import jax.numpy as jnp
from jax.experimental import pallas as pl
from jax.experimental.pallas import tpu as pltpu

_SUBLANE_BY_ITEMSIZE = {4: 8, 2: 16, 1: 32}
_TARGET_BLOCK_BYTES = 4 << 20        # ~4 MiB input block (+ out, x2 buffers ~ 16 MiB)
_MIN_PALLAS_ELEMS = 1 << 17          # below this, plain XLA sigmoid is already optimal
_VMEM_LIMIT_BYTES = 32 * 1024 * 1024


def _round_up(a, m):
    return ((a + m - 1) // m) * m


def _fermi_dirac_kernel(params_ref, x_ref, o_ref):
    r = params_ref[0]
    inv_t = params_ref[1]
    x = x_ref[...].astype(jnp.float32)
    z = (r - x) * inv_t
    # sigmoid(z) == 0.5 * tanh(z / 2) + 0.5 : one EUP transcendental, no select,
    # no reciprocal, numerically stable and bounded even on ragged-tail garbage.
    o_ref[...] = (0.5 * jnp.tanh(0.5 * z) + 0.5).astype(o_ref.dtype)


def fermi_dirac_decoder(dist, r, t, *,
                        min_pallas_elems=_MIN_PALLAS_ELEMS,
                        target_block_bytes=_TARGET_BLOCK_BYTES):
    """probs = sigmoid((r - dist) / t); same shape/dtype as `dist` (any rank)."""
    orig_shape = dist.shape
    dtype = dist.dtype
    n = math.prod(orig_shape) if orig_shape else 1
    inv_t = 1.0 / t   # works for Python scalars and traced JAX scalars

    if n == 0 or n < min_pallas_elems:
        # pallas_call fixed cost dominates at small n; XLA's fused elementwise wins.
        return jax.nn.sigmoid((r - dist) * inv_t).astype(dtype)

    itemsize = jnp.dtype(dtype).itemsize
    sublane = _SUBLANE_BY_ITEMSIZE.get(itemsize, 8)

    # ---- lane-dense 2-D view, avoiding pad/slice copies whenever possible ----
    x2d = None
    needs_pad = False
    if dist.ndim >= 2 and orig_shape[-1] % 128 == 0 and orig_shape[-1] <= 16384:
        c = orig_shape[-1]
        rows = n // c
        x2d = dist.reshape(rows, c)                 # collapse leading dims (free)
    else:
        c = None
        for lanes in (512, 256, 128):
            if n % lanes == 0:
                c = lanes
                rows = n // c
                x2d = dist.reshape(rows, c)         # flat lane-dense view (free)
                break
        if c is None:
            # Awkward element count: one extra HBM pass for the pad (rare).
            # TODO(synk): handle the <128-element remainder with a tiny tail op
            # instead of padding/slicing the whole array.
            c = 128
            rows = pl.cdiv(n, c)
            flat = jnp.pad(jnp.ravel(dist), (0, rows * c - n))
            x2d = flat.reshape(rows, c)
            needs_pad = True

    # ---- row tiling: big blocks, dtype-aware sublanes, keep grid >= ~4 steps ----
    budget_rows = max(sublane,
                      (target_block_bytes // (c * itemsize)) // sublane * sublane)
    quarter_rows = _round_up(pl.cdiv(rows, 4), sublane)   # >= 4 blocks when possible
    tr = max(sublane, min(budget_rows, quarter_rows))
    if tr >= rows:
        tr = rows            # single block spanning the full extent (always legal)
    grid = (pl.cdiv(rows, tr),)

    params = jnp.stack([jnp.asarray(r, dtype=jnp.float32),
                        jnp.asarray(inv_t, dtype=jnp.float32)])

    out2d = pl.pallas_call(
        _fermi_dirac_kernel,
        out_shape=jax.ShapeDtypeStruct((rows, c), dtype),
        grid=grid,
        in_specs=[
            pl.BlockSpec(memory_space=pltpu.MemorySpace.SMEM),   # (r, 1/t) scalars
            pl.BlockSpec((tr, c), lambda i: (i, 0)),
        ],
        out_specs=pl.BlockSpec((tr, c), lambda i: (i, 0)),
        compiler_params=pltpu.CompilerParams(
            dimension_semantics=("parallel",),      # shard row-blocks across TCs
            vmem_limit_bytes=_VMEM_LIMIT_BYTES,
        ),
    )(params, x2d)

    if needs_pad:
        return out2d.reshape(-1)[:n].reshape(orig_shape)
    return out2d.reshape(orig_shape)


if __name__ == "__main__":
    key = jax.random.PRNGKey(0)
    r, t = 2.0, 1.0

    # Small deterministic distances (non-negative), consistent with the module.
    dist = jnp.abs(jax.random.normal(key, (2, 4, 16, 16), jnp.float32)) * 3.0

    # Force the Pallas path even at this small demo size (default bypasses to XLA).
    probs = fermi_dirac_decoder(dist, r, t, min_pallas_elems=0)
    jax.block_until_ready(probs)
    ref = jax.nn.sigmoid((r - dist) / t)
    assert probs.shape == dist.shape and probs.dtype == dist.dtype
    assert bool(jnp.allclose(probs, ref, atol=1e-5, rtol=1e-5))

    # bf16 input with a lane-aligned last dim exercises the zero-copy fast path.
    dist_bf16 = (jnp.abs(jax.random.normal(jax.random.PRNGKey(1), (16, 256),
                                           jnp.float32)) * 3.0).astype(jnp.bfloat16)
    probs_bf16 = fermi_dirac_decoder(dist_bf16, r, t, min_pallas_elems=0)
    jax.block_until_ready(probs_bf16)
    ref_bf16 = jax.nn.sigmoid((r - dist_bf16.astype(jnp.float32)) / t)
    assert probs_bf16.dtype == jnp.bfloat16
    assert bool(jnp.allclose(probs_bf16.astype(jnp.float32), ref_bf16, atol=1e-2))

    # Awkward element count exercises the padded fallback path.
    dist_odd = jnp.abs(jax.random.normal(jax.random.PRNGKey(2), (3, 7, 11),
                                         jnp.float32)) * 3.0
    probs_odd = fermi_dirac_decoder(dist_odd, r, t, min_pallas_elems=0)
    jax.block_until_ready(probs_odd)
    ref_odd = jax.nn.sigmoid((r - dist_odd) / t)
    assert bool(jnp.allclose(probs_odd, ref_odd, atol=1e-5, rtol=1e-5))

    print("KERNEL_OK")
</pallas_src>

<mosaic_0001>
module attributes {stable_mosaic.version = 11 : i64} {
  func.func @_fermi_dirac_kernel(%arg0: i32, %arg1: memref<2xf32, #tpu.memory_space<smem>>, %arg2: memref<4x512xf32, #tpu.memory_space<vmem>>, %arg3: memref<4x512xf32, #tpu.memory_space<vmem>>) attributes {dimension_semantics = [#tpu.dimension_semantics<parallel>], iteration_bounds = array<i64: 1>, scalar_prefetch = 0 : i64, scratch_operands = 0 : i64, tpu.core_type = #tpu.core_type<tc>, window_params = [{transform_indices = @transform_0, window_bounds = array<i64: 2>}, {transform_indices = @transform_1, window_bounds = array<i64: 4, 512>}, {transform_indices = @transform_2, window_bounds = array<i64: 4, 512>}]} {
    %c0 = arith.constant 0 : index
    %0 = memref.load %arg1[%c0] : memref<2xf32, #tpu.memory_space<smem>>
    %c1 = arith.constant 1 : index
    %1 = memref.load %arg1[%c1] : memref<2xf32, #tpu.memory_space<smem>>
    %c0_0 = arith.constant 0 : index
    %c0_1 = arith.constant 0 : index
    %2 = vector.load %arg2[%c0_0, %c0_1] : memref<4x512xf32, #tpu.memory_space<vmem>>, vector<4x512xf32>
    %3 = vector.broadcast %0 : f32 to vector<4x512xf32>
    %4 = arith.subf %3, %2 : vector<4x512xf32>
    %5 = vector.broadcast %1 : f32 to vector<4x512xf32>
    %6 = arith.mulf %4, %5 : vector<4x512xf32>
    %cst = arith.constant 5.000000e-01 : f32
    %7 = vector.broadcast %cst : f32 to vector<4x512xf32>
    %8 = arith.mulf %7, %6 : vector<4x512xf32>
    %9 = math.tanh %8 : vector<4x512xf32>
    %cst_2 = arith.constant 5.000000e-01 : f32
    %10 = vector.broadcast %cst_2 : f32 to vector<4x512xf32>
    %11 = arith.mulf %10, %9 : vector<4x512xf32>
    %cst_3 = arith.constant 5.000000e-01 : f32
    %12 = vector.broadcast %cst_3 : f32 to vector<4x512xf32>
    %13 = arith.addf %11, %12 : vector<4x512xf32>
    %c0_4 = arith.constant 0 : index
    %c0_5 = arith.constant 0 : index
    %14 = vector.load %arg3[%c0_4, %c0_5] : memref<4x512xf32, #tpu.memory_space<vmem>>, vector<4x512xf32>
    tpu.vector_store %arg3[%c0_4, %c0_5], %13 {strides = array<i32>} : memref<4x512xf32, #tpu.memory_space<vmem>>, vector<4x512xf32>,
    return
  }
  func.func @transform_0(%arg0: i32) -> i32 {
    %c0_i32 = arith.constant 0 : i32
    %c0_i32_0 = arith.constant 0 : i32
    return %c0_i32 : i32
  }
  func.func @transform_1(%arg0: i32) -> (i32, i32) {
    %c0_i32 = arith.constant 0 : i32
    %c0_i32_0 = arith.constant 0 : i32
    return %arg0, %c0_i32 : i32, i32
  }
  func.func @transform_2(%arg0: i32) -> (i32, i32) {
    %c0_i32 = arith.constant 0 : i32
    %c0_i32_0 = arith.constant 0 : i32
    return %arg0, %c0_i32 : i32, i32
  }
}

</mosaic_0001>

<llo_original>
// kernel: tpu_custom_call.1
$region0: #{tpu_custom_call.1}
  #allocation0 [shape = 'u32[]', space=smem, size = 0x4, offset = 0x4, fixed_abs, tag = 'smem constant byte address 0x4 - core index']
  #allocation1 [shape = 'u32[144,128]{1,0:T(1,128)}', space=vmem, size = 0x12000, scoped, tag = 'internal scratch']
  %s0 = inlined_call_operand.hbm [shape: f32[2], index: 0, kind: input, shape index: {}]
  %s1 = inlined_call_operand.hbm [shape: f32[4,512], index: 1, kind: input, shape index: {}]
  %s2 = inlined_call_operand.hbm [shape: f32[4,512], index: 2, kind: output, shape index: {}]
  %s3 = sld [smem:[#allocation0]]
  $region26: #{tpu_custom_call.1} parent=0
    _
  %s5 = ssub.s32 1, %s3
  %s6 = scalar_select 0, %s5, %s3
  $region1: #{tpu_custom_call.1} parent=0
    #allocation2 [shape = 'u8[512]{0}', space=smem, size = 0x200, scoped, tag = 'input window, operand 0, single buffered']
    #allocation3 [shape = 's32[1]{0}', space=sflag, size = 0x4, scoped, tag = 'scoped memory for tpu_custom_call.1']
    #allocation4 [shape = 's32[1]{0}', space=sflag, size = 0x4, scoped, tag = 'scoped memory for tpu_custom_call.1']
    #allocation5 [shape = 's32[1]{0}', space=sflag, size = 0x4, scoped, tag = 'scoped memory for tpu_custom_call.1']
    #allocation6 [shape = 'u8[8192]{0}', space=vmem, size = 0x2000, scoped, tag = 'input window, operand 1, single buffered']
    #allocation7 [shape = 'u8[8192]{0}', space=vmem, size = 0x2000, scoped, tag = 'output window, operand 0, single buffered']
    %7 = vsyncpa [#allocation5], 0
    %8 = vsyncpa [#allocation3], 0
    %9 = vsyncpa [#allocation4], 0
    // Predicated region
    $region2: #{tpu_custom_call.1} parent=1 // pred_check
      _
    $region3: #{tpu_custom_call.1} parent=1 // pred_check_branch
      %11 = sbr.rel (0) target = $region5
    $region4: #{tpu_custom_call.1} parent=1 // pred_region
      %s13 = ssub.s32 16, 16
      %14 = vsyncadd [#allocation5], %s13
      %17 = dma.hbm_to_smem %s0, 16, [#allocation2], [#allocation5]
    $region5: #{tpu_custom_call.1} parent=1 // pred_fallthru
      _
    // Predicated region
    $region6: #{tpu_custom_call.1} parent=1 // pred_check
      _
    $region7: #{tpu_custom_call.1} parent=1 // pred_check_branch
      %19 = sbr.rel (0) target = $region9
    $region8: #{tpu_custom_call.1} parent=1 // pred_region
      %s21 = ssub.s32 256, 256
      %22 = vsyncadd [#allocation3], %s21
      %s24 = sshll.u32 [#allocation6], 4
      %s25 = int_to_ptr.vmem [resolvable:$true] %s24
      %27 = dma.hbm_to_vmem [thread:$0]  %s1, 256, %s25, [#allocation3]
    $region9: #{tpu_custom_call.1} parent=1 // pred_fallthru
      _
    // Predicated region
    $region10: #{tpu_custom_call.1} parent=1 // pred_check
      _
    $region11: #{tpu_custom_call.1} parent=1 // pred_check_branch
      %29 = sbr.rel (0) target = $region13
    $region12: #{tpu_custom_call.1} parent=1 // pred_region
      %30 = dma.done [#allocation5], 16
    $region13: #{tpu_custom_call.1} parent=1 // pred_fallthru
      _
    // Predicated region
    $region14: #{tpu_custom_call.1} parent=1 // pred_check
      _
    $region15: #{tpu_custom_call.1} parent=1 // pred_check_branch
      %32 = sbr.rel (0) target = $region17
    $region16: #{tpu_custom_call.1} parent=1 // pred_region
      %33 = dma.done [#allocation3], 256
    $region17: #{tpu_custom_call.1} parent=1 // pred_fallthru
      _
    %34 = sfence
    %s35 = sld [smem:[#allocation2]]
    %s36 = sld [smem:[#allocation2 + $0x1]]
    %v37 = vld [vmem:[#allocation6] sm:$0xff]
    %v38 = vld [vmem:[#allocation6 + $0x8] sm:$0xff]
    %v39 = vstv %s35
    %v40 = vsub.f32 %v39, %v37
    %v41 = vsub.f32 %v39, %v38
    %v42 = vstv %s36
    %v43 = vmul.f32 %v40, %v42
    %v44 = vmul.f32 %v41, %v42
    %v45 = vmul.f32 %v43, 0.5
    %v46 = vmul.f32 %v44, 0.5
    %v47 = vtanh.pop %v45
    %v48 = vtanh.pop %v46
    %v49 = vmul.f32 %v47, 0.5
    %v50 = vmul.f32 %v48, 0.5
    %v51 = vadd.f32 %v49, 0.5
    %v52 = vadd.f32 %v50, 0.5
    %53 = vst [vmem:[#allocation7] sm:$0xff] %v51
    %54 = vst [vmem:[#allocation7 + $0x8] sm:$0xff] %v52
    // Predicated region
    $region18: #{tpu_custom_call.1} parent=1 // pred_check
      _
    $region19: #{tpu_custom_call.1} parent=1 // pred_check_branch
      %56 = sbr.rel (0) target = $region21
    $region20: #{tpu_custom_call.1} parent=1 // pred_region
      %s58 = ssub.s32 256, 256
      %59 = vsyncadd [#allocation4], %s58
      %s61 = sshll.u32 [#allocation7], 4
      %s62 = int_to_ptr.vmem [resolvable:$true] %s61
      %64 = dma.vmem_to_hbm [thread:$0]  %s62, 256, %s2, [#allocation4]
    $region21: #{tpu_custom_call.1} parent=1 // pred_fallthru
      _
    // Predicated region
    $region22: #{tpu_custom_call.1} parent=1 // pred_check
      _
    $region23: #{tpu_custom_call.1} parent=1 // pred_check_branch
      %66 = sbr.rel (0) target = $region25
    $region24: #{tpu_custom_call.1} parent=1 // pred_region
      %67 = dma.done [#allocation4], 256
    $region25: #{tpu_custom_call.1} parent=1 // pred_fallthru
      _
    %68 = vsyncpa [#allocation3], 1
    %69 = vsyncpa [#allocation4], 1
    %70 = vsyncpa [#allocation5], 1

</llo_original>
